<compile_context>
chip_gen: v5e
topology: v5e:2x2
jax: 0.10.0
libtpu: 0.0.40
codegen_flags: <defaults>
</compile_context>

<pallas_src>
import functools

import jax
import jax.numpy as jnp
from jax.experimental import pallas as pl
from jax.experimental.pallas import tpu as pltpu


def ffn_kernel(x_ref, w1_ref, b1_ref, w2_ref, b2_ref, o_ref, *scratch):
    """One (row-tile i, dim_ff-tile k) grid step of the fused FFN.

    If no scratch ref is passed, the f32 output block itself is the
    accumulator (its block index is k-invariant, so it stays VMEM-resident
    across the reduction axis)."""
    acc_ref = scratch[0] if scratch else o_ref
    k = pl.program_id(1)

    @pl.when(k == 0)
    def _init():
        acc_ref[...] = jnp.zeros_like(acc_ref)

    # First linear (partial over dim_ff): (tm, dim) @ (dim, tkff).
    # x is pre-cast to the weight dtype in the wrapper -> no per-step cast here.
    h = jnp.dot(x_ref[...], w1_ref[...], preferred_element_type=jnp.float32)
    # Bias (per dim_ff chunk) + ReLU in f32.  (Dropout: identity in eval mode.)
    h = jnp.maximum(h + b1_ref[...], 0.0)

    # Second linear partial sum: (tm, tkff) @ (tkff, dim), accumulated in f32.
    acc_ref[...] += jnp.dot(h.astype(w2_ref.dtype), w2_ref[...],
                            preferred_element_type=jnp.float32)

    @pl.when(k == pl.num_programs(1) - 1)
    def _finalize():
        # b2 added exactly once, at the last reduction step.
        o_ref[...] = (acc_ref[...] + b2_ref[...]).astype(o_ref.dtype)


def _round_up(x, m):
    return ((x + m - 1) // m) * m


def _vmem_capacity_bytes():
    """Physical VMEM of the local TPU; conservative 64 MiB fallback."""
    try:
        info = pltpu.get_tpu_info()
        cap = int(getattr(info, "vmem_capacity_bytes", 0) or 0)
        if cap > 0:
            return cap
    except Exception:
        pass
    return 64 << 20  # v7x per-core VMEM (safe lower bound)


def _plan(M, dim, dim_ff, x_bytes, w_bytes, out_bytes, need_acc, vmem_cap):
    """Pick (tm, tkff, dim_ff_pad, vmem_limit) from the VMEM budget."""
    tm = min(512, _round_up(M, 8))

    def budget(tm_, tkff_):
        return (2 * tm_ * dim * x_bytes            # x row tile (double-buffered)
                + 2 * dim * tkff_ * w_bytes        # W1 column block
                + 2 * tkff_ * dim * w_bytes        # W2 row block
                + 2 * 8 * tkff_ * 4                # b1 slice (sublane-padded, f32)
                + 2 * 8 * dim * 4                  # b2 (f32)
                + 2 * tm_ * dim * out_bytes        # output tile
                + (tm_ * dim * 4 if need_acc else 0)   # f32 accumulator scratch
                + tm_ * tkff_ * 4)                 # f32 intermediate h

    # Weight-resident fast path: keep the whole dim_ff axis in one block so
    # the W1/W2 index maps are grid-invariant -> weights DMA'd from HBM once.
    if budget(tm, dim_ff) <= int(0.55 * vmem_cap):
        tkff, dim_ff_pad = dim_ff, dim_ff
    else:
        tkff = min(512, _round_up(dim_ff, 128))
        # Safety valves for very large models: shrink tm, then tkff.
        while budget(tm, tkff) > int(0.70 * vmem_cap) and tm > 128:
            tm = max(128, ((tm // 2 + 7) // 8) * 8)
        while budget(tm, tkff) > int(0.70 * vmem_cap) and tkff > 128:
            tkff //= 2
        dim_ff_pad = _round_up(dim_ff, tkff)

    vmem_limit = max(32 << 20,
                     min(int(budget(tm, tkff) * 1.4) + (4 << 20),
                         int(0.82 * vmem_cap)))       # leave ~18% headroom
    return tm, tkff, dim_ff_pad, vmem_limit


@functools.partial(jax.jit, static_argnames=("tm", "tkff"))
def positionwise_ffn(x, w1, b1, w2, b2, *, tm=None, tkff=None):
    """x: [B, S, dim]; w1: [dim, dim_ff]; b1: [dim_ff]; w2: [dim_ff, dim]; b2: [dim].

    Weights in (in, out) layout (transposed from PyTorch nn.Linear)."""
    B, S, dim = x.shape
    dim_ff = w1.shape[1]
    M = B * S

    out_dtype = x.dtype
    compute_dtype = w1.dtype                     # bf16 MXU operands when weights are bf16
    need_acc = jnp.dtype(out_dtype) != jnp.dtype(jnp.float32)

    x_bytes = jnp.dtype(compute_dtype).itemsize
    w_bytes = jnp.dtype(w1.dtype).itemsize
    out_bytes = jnp.dtype(out_dtype).itemsize

    vmem_cap = _vmem_capacity_bytes()
    a_tm, a_tkff, dim_ff_pad, vmem_limit = _plan(
        M, dim, dim_ff, x_bytes, w_bytes, out_bytes, need_acc, vmem_cap)
    if tm is None:
        tm = a_tm
    if tkff is None:
        tkff = a_tkff
    else:
        dim_ff_pad = _round_up(dim_ff, tkff)
    assert dim_ff_pad % tkff == 0, "tkff must divide (padded) dim_ff"

    # Pad rows so M divides evenly into tm-sized tiles (tail rows kept, sliced off later).
    M_pad = _round_up(M, tm)
    x2d = x.reshape(M, dim).astype(compute_dtype)   # single cast: halves x DMA/VMEM
    if M_pad != M:
        x2d = jnp.pad(x2d, ((0, M_pad - M), (0, 0)))

    # Zero-pad dim_ff (reduction axis) if needed: relu(x@0 + 0) = 0 -> exact.
    w1p, w2p = w1, w2
    b1f = b1.astype(jnp.float32)
    if dim_ff_pad != dim_ff:
        pad = dim_ff_pad - dim_ff
        w1p = jnp.pad(w1, ((0, 0), (0, pad)))
        w2p = jnp.pad(w2, ((0, pad), (0, 0)))
        b1f = jnp.pad(b1f, ((0, pad),))
    b1_2d = b1f.reshape(1, dim_ff_pad)
    b2_2d = b2.astype(jnp.float32).reshape(1, dim)

    n_row_tiles = M_pad // tm
    n_k = dim_ff_pad // tkff
    # Weights are HBM-read once when resident (n_k == 1), else once per row tile.
    weight_reads = 1 if n_k == 1 else n_row_tiles

    cost = pl.CostEstimate(
        flops=4 * M * dim * dim_ff,                # two matmuls
        transcendentals=0,
        bytes_accessed=(M_pad * dim * x_bytes
                        + weight_reads * (w1p.size + w2p.size) * w_bytes
                        + weight_reads * dim_ff_pad * 4 + dim * 4
                        + M_pad * dim * out_bytes),
    )

    grid = (n_row_tiles, n_k)                      # reduction (dim_ff) axis last
    scratch = [pltpu.VMEM((tm, dim), jnp.float32)] if need_acc else []

    out2d = pl.pallas_call(
        ffn_kernel,
        out_shape=jax.ShapeDtypeStruct((M_pad, dim), out_dtype),
        grid_spec=pltpu.PrefetchScalarGridSpec(
            num_scalar_prefetch=0,
            grid=grid,
            in_specs=[
                pl.BlockSpec((tm, dim), lambda i, k: (i, 0)),      # x row tile (k-invariant)
                pl.BlockSpec((dim, tkff), lambda i, k: (0, k)),    # W1 column block
                pl.BlockSpec((1, tkff), lambda i, k: (0, k)),      # b1 slice
                pl.BlockSpec((tkff, dim), lambda i, k: (k, 0)),    # W2 row block
                pl.BlockSpec((1, dim), lambda i, k: (0, 0)),       # b2 (grid-invariant)
            ],
            out_specs=pl.BlockSpec((tm, dim), lambda i, k: (i, 0)),
            scratch_shapes=scratch,
        ),
        compiler_params=pltpu.CompilerParams(
            dimension_semantics=("parallel", "arbitrary"),
            vmem_limit_bytes=vmem_limit,
        ),
        cost_estimate=cost,
    )(x2d, w1p, b1_2d, w2p, b2_2d)

    return out2d[:M].reshape(B, S, dim)


def init_params(key, dim, dim_ff, w_dtype=jnp.bfloat16):
    """Deterministic init mimicking nn.Linear (uniform +/- 1/sqrt(fan_in)).

    Weights returned in (in, out) layout, stored in bf16 (MXU-native); biases f32."""
    k1, k2, k3, k4 = jax.random.split(key, 4)
    bound1 = 1.0 / (dim ** 0.5)
    bound2 = 1.0 / (dim_ff ** 0.5)
    w1 = jax.random.uniform(k1, (dim, dim_ff), jnp.float32, -bound1, bound1).astype(w_dtype)
    b1 = jax.random.uniform(k2, (dim_ff,), jnp.float32, -bound1, bound1)
    w2 = jax.random.uniform(k3, (dim_ff, dim), jnp.float32, -bound2, bound2).astype(w_dtype)
    b2 = jax.random.uniform(k4, (dim,), jnp.float32, -bound2, bound2)
    return w1, b1, w2, b2


if __name__ == "__main__":
    batch, seq, dim, dim_ff = 2, 8, 32, 64
    key = jax.random.PRNGKey(0)
    kx, kp = jax.random.split(key)

    x = jax.random.normal(kx, (batch, seq, dim), jnp.float32)
    w1, b1, w2, b2 = init_params(kp, dim, dim_ff)

    # f32 activations: output block is the accumulator (no scratch path).
    y = jax.block_until_ready(positionwise_ffn(x, w1, b1, w2, b2))
    assert y.shape == (batch, seq, dim) and y.dtype == x.dtype

    # Reference mirroring the kernel's mixed precision (bf16 MXU operands, f32 accum).
    x2d = x.reshape(-1, dim)
    h = jnp.dot(x2d.astype(w1.dtype), w1, preferred_element_type=jnp.float32) + b1
    h = jnp.maximum(h, 0.0)
    ref = (jnp.dot(h.astype(w2.dtype), w2, preferred_element_type=jnp.float32)
           + b2).reshape(batch, seq, dim)
    assert jnp.allclose(y, ref.astype(y.dtype), atol=1e-4, rtol=1e-4), \
        "mismatch vs mixed-precision reference"

    # Loose check against the pure-f32 PyTorch-style reference (bf16 weights ~1e-3 rel err).
    ref_f32 = (jnp.maximum(x2d @ w1.astype(jnp.float32) + b1, 0.0)
               @ w2.astype(jnp.float32) + b2).reshape(batch, seq, dim)
    assert jnp.allclose(y, ref_f32, atol=5e-2, rtol=5e-2), "mismatch vs f32 reference"

    # bf16 activations exercise the scratch-accumulator (non-f32 output) path.
    yb = jax.block_until_ready(positionwise_ffn(x.astype(jnp.bfloat16), w1, b1, w2, b2))
    assert yb.shape == (batch, seq, dim) and yb.dtype == jnp.bfloat16
    assert jnp.allclose(yb.astype(jnp.float32), ref, atol=5e-2, rtol=5e-2), \
        "bf16-output path mismatch"

    print("KERNEL_OK")
</pallas_src>

<mosaic_0001>
module attributes {stable_mosaic.version = 11 : i64} {
  func.func @ffn_kernel(%arg0: i32, %arg1: i32, %arg2: memref<16x32xbf16, #tpu.memory_space<vmem>>, %arg3: memref<32x64xbf16, #tpu.memory_space<vmem>>, %arg4: memref<1x64xf32, #tpu.memory_space<vmem>>, %arg5: memref<64x32xbf16, #tpu.memory_space<vmem>>, %arg6: memref<1x32xf32, #tpu.memory_space<vmem>>, %arg7: memref<16x32xf32, #tpu.memory_space<vmem>>) attributes {dimension_semantics = [#tpu.dimension_semantics<parallel>, #tpu.dimension_semantics<arbitrary>], iteration_bounds = array<i64: 1, 1>, scalar_prefetch = 0 : i64, scratch_operands = 0 : i64, tpu.core_type = #tpu.core_type<tc>, window_params = [{transform_indices = @transform_0, window_bounds = array<i64: 16, 32>}, {transform_indices = @transform_1, window_bounds = array<i64: 32, 64>}, {transform_indices = @transform_2, window_bounds = array<i64: 1, 64>}, {transform_indices = @transform_3, window_bounds = array<i64: 64, 32>}, {pipeline_mode = #tpu.pipeline_mode<synchronous>, transform_indices = @transform_4, window_bounds = array<i64: 1, 32>}, {transform_indices = @transform_5, window_bounds = array<i64: 16, 32>}]} {
    %c0_i32 = arith.constant 0 : i32
    %0 = arith.cmpi eq, %arg1, %c0_i32 : i32
    %1 = arith.extui %0 : i1 to i32
    %c0_i32_0 = arith.constant 0 : i32
    %2 = arith.cmpi ne, %1, %c0_i32_0 : i32
    scf.if %2 {
      %cst_16 = arith.constant 0.000000e+00 : f32
      %20 = vector.broadcast %cst_16 : f32 to vector<16x32xf32>
      %c0_17 = arith.constant 0 : index
      %c0_18 = arith.constant 0 : index
      %21 = vector.load %arg7[%c0_17, %c0_18] : memref<16x32xf32, #tpu.memory_space<vmem>>, vector<16x32xf32>
      tpu.vector_store %arg7[%c0_17, %c0_18], %20 {strides = array<i32>} : memref<16x32xf32, #tpu.memory_space<vmem>>, vector<16x32xf32>,
    } else {
    }
    %c0 = arith.constant 0 : index
    %c0_1 = arith.constant 0 : index
    %3 = vector.load %arg2[%c0, %c0_1] : memref<16x32xbf16, #tpu.memory_space<vmem>>, vector<16x32xbf16>
    %c0_2 = arith.constant 0 : index
    %c0_3 = arith.constant 0 : index
    %4 = vector.load %arg3[%c0_2, %c0_3] : memref<32x64xbf16, #tpu.memory_space<vmem>>, vector<32x64xbf16>
    %cst = arith.constant dense<0.000000e+00> : vector<16x64xf32>
    %5 = tpu.matmul %3, %4, %cst {dimension_numbers = #tpu.dot_dimension_numbers<[1], [0], [0], [1], [0, 0, 1, 1], [], []>} : vector<16x32xbf16>, vector<32x64xbf16>, vector<16x64xf32> -> vector<16x64xf32>
    %c0_4 = arith.constant 0 : index
    %c0_5 = arith.constant 0 : index
    %6 = vector.load %arg4[%c0_4, %c0_5] : memref<1x64xf32, #tpu.memory_space<vmem>>, vector<1x64xf32>
    %7 = vector.broadcast %6 : vector<1x64xf32> to vector<16x64xf32>
    %8 = arith.addf %5, %7 : vector<16x64xf32>
    %cst_6 = arith.constant 0.000000e+00 : f32
    %9 = vector.broadcast %cst_6 : f32 to vector<16x64xf32>
    %10 = arith.maximumf %8, %9 : vector<16x64xf32>
    %c0_7 = arith.constant 0 : index
    %c0_8 = arith.constant 0 : index
    %11 = vector.load %arg7[%c0_7, %c0_8] : memref<16x32xf32, #tpu.memory_space<vmem>>, vector<16x32xf32>
    %12 = arith.truncf %10 : vector<16x64xf32> to vector<16x64xbf16>
    %c0_9 = arith.constant 0 : index
    %c0_10 = arith.constant 0 : index
    %13 = vector.load %arg5[%c0_9, %c0_10] : memref<64x32xbf16, #tpu.memory_space<vmem>>, vector<64x32xbf16>
    %cst_11 = arith.constant dense<0.000000e+00> : vector<16x32xf32>
    %14 = tpu.matmul %12, %13, %cst_11 {dimension_numbers = #tpu.dot_dimension_numbers<[1], [0], [0], [1], [0, 0, 1, 1], [], []>} : vector<16x64xbf16>, vector<64x32xbf16>, vector<16x32xf32> -> vector<16x32xf32>
    %15 = arith.addf %11, %14 : vector<16x32xf32>
    %c0_12 = arith.constant 0 : index
    %c0_13 = arith.constant 0 : index
    %16 = vector.load %arg7[%c0_12, %c0_13] : memref<16x32xf32, #tpu.memory_space<vmem>>, vector<16x32xf32>
    tpu.vector_store %arg7[%c0_12, %c0_13], %15 {strides = array<i32>} : memref<16x32xf32, #tpu.memory_space<vmem>>, vector<16x32xf32>,
    %c0_i32_14 = arith.constant 0 : i32
    %17 = arith.cmpi eq, %arg1, %c0_i32_14 : i32
    %18 = arith.extui %17 : i1 to i32
    %c0_i32_15 = arith.constant 0 : i32
    %19 = arith.cmpi ne, %18, %c0_i32_15 : i32
    scf.if %19 {
      %c0_16 = arith.constant 0 : index
      %c0_17 = arith.constant 0 : index
      %20 = vector.load %arg7[%c0_16, %c0_17] : memref<16x32xf32, #tpu.memory_space<vmem>>, vector<16x32xf32>
      %c0_18 = arith.constant 0 : index
      %c0_19 = arith.constant 0 : index
      %21 = vector.load %arg6[%c0_18, %c0_19] : memref<1x32xf32, #tpu.memory_space<vmem>>, vector<1x32xf32>
      %22 = vector.broadcast %21 : vector<1x32xf32> to vector<16x32xf32>
      %23 = arith.addf %20, %22 : vector<16x32xf32>
      %c0_20 = arith.constant 0 : index
      %c0_21 = arith.constant 0 : index
      %24 = vector.load %arg7[%c0_20, %c0_21] : memref<16x32xf32, #tpu.memory_space<vmem>>, vector<16x32xf32>
      tpu.vector_store %arg7[%c0_20, %c0_21], %23 {strides = array<i32>} : memref<16x32xf32, #tpu.memory_space<vmem>>, vector<16x32xf32>,
    } else {
    }
    return
  }
  func.func @transform_0(%arg0: i32, %arg1: i32) -> (i32, i32) {
    %c0_i32 = arith.constant 0 : i32
    %c0_i32_0 = arith.constant 0 : i32
    return %arg0, %c0_i32 : i32, i32
  }
  func.func @transform_1(%arg0: i32, %arg1: i32) -> (i32, i32) {
    %c0_i32 = arith.constant 0 : i32
    %c0_i32_0 = arith.constant 0 : i32
    return %c0_i32, %arg1 : i32, i32
  }
  func.func @transform_2(%arg0: i32, %arg1: i32) -> (i32, i32) {
    %c0_i32 = arith.constant 0 : i32
    %c0_i32_0 = arith.constant 0 : i32
    return %c0_i32, %arg1 : i32, i32
  }
  func.func @transform_3(%arg0: i32, %arg1: i32) -> (i32, i32) {
    %c0_i32 = arith.constant 0 : i32
    %c0_i32_0 = arith.constant 0 : i32
    return %arg1, %c0_i32 : i32, i32
  }
  func.func @transform_4(%arg0: i32, %arg1: i32) -> (i32, i32) {
    %c0_i32 = arith.constant 0 : i32
    %c0_i32_0 = arith.constant 0 : i32
    %c0_i32_1 = arith.constant 0 : i32
    return %c0_i32, %c0_i32_0 : i32, i32
  }
  func.func @transform_5(%arg0: i32, %arg1: i32) -> (i32, i32) {
    %c0_i32 = arith.constant 0 : i32
    %c0_i32_0 = arith.constant 0 : i32
    return %arg0, %c0_i32 : i32, i32
  }
}

</mosaic_0001>

<llo_original>
// kernel: positionwise_ffn.1
$region0: #{positionwise_ffn.1}
  #allocation0 [shape = 'u32[]', space=smem, size = 0x4, offset = 0x4, fixed_abs, tag = 'smem constant byte address 0x4 - core index']
  #allocation1 [shape = 'u32[72,128]{1,0:T(1,128)}', space=vmem, size = 0x9000, scoped, tag = 'internal scratch']
  %s0 = inlined_call_operand.vmem [shape: bf16[16,32], index: 0, kind: input, shape index: {}]
  %s1 = inlined_call_operand.vmem [shape: bf16[32,64], index: 1, kind: input, shape index: {}]
  %s2 = inlined_call_operand.vmem [shape: f32[1,64], index: 2, kind: input, shape index: {}]
  %s3 = inlined_call_operand.vmem [shape: bf16[64,32], index: 3, kind: input, shape index: {}]
  %s4 = inlined_call_operand.vmem [shape: f32[1,32], index: 4, kind: input, shape index: {}]
  %s5 = inlined_call_operand.hbm [shape: f32[16,32], index: 5, kind: output, shape index: {}]
  %s6 = sld [smem:[#allocation0]]
  $region38: #{positionwise_ffn.1} parent=0
    _
  %s8 = ssub.s32 1, %s6
  %s9 = scalar_select 0, %s8, %s6
  $region1: #{positionwise_ffn.1} parent=0
    #allocation2 [shape = 'u8[8192]{0}', space=vmem, size = 0x2000, scoped, tag = 'output window, operand 0, single buffered']
    #allocation3 [shape = 's32[1]{0}', space=sflag, size = 0x4, scoped, tag = 'scoped memory for positionwise_ffn.1']
    %10 = vsyncpa [#allocation3], 0
    // Predicated region
    $region2: #{positionwise_ffn.1} parent=1 // pred_check
      _
    $region3: #{positionwise_ffn.1} parent=1 // pred_check_branch
      %12 = sbr.rel (0) target = $region5
    $region4: #{positionwise_ffn.1} parent=1 // pred_region
      _
    $region5: #{positionwise_ffn.1} parent=1 // pred_fallthru
      _
    // Predicated region
    $region6: #{positionwise_ffn.1} parent=1 // pred_check
      _
    $region7: #{positionwise_ffn.1} parent=1 // pred_check_branch
      %14 = sbr.rel (0) target = $region9
    $region8: #{positionwise_ffn.1} parent=1 // pred_region
      _
    $region9: #{positionwise_ffn.1} parent=1 // pred_fallthru
      _
    // Predicated region
    $region10: #{positionwise_ffn.1} parent=1 // pred_check
      _
    $region11: #{positionwise_ffn.1} parent=1 // pred_check_branch
      %16 = sbr.rel (0) target = $region13
    $region12: #{positionwise_ffn.1} parent=1 // pred_region
      _
    $region13: #{positionwise_ffn.1} parent=1 // pred_fallthru
      _
    // Predicated region
    $region14: #{positionwise_ffn.1} parent=1 // pred_check
      _
    $region15: #{positionwise_ffn.1} parent=1 // pred_check_branch
      %18 = sbr.rel (0) target = $region17
    $region16: #{positionwise_ffn.1} parent=1 // pred_region
      _
    $region17: #{positionwise_ffn.1} parent=1 // pred_fallthru
      _
    // Predicated region
    $region18: #{positionwise_ffn.1} parent=1 // pred_check
      _
    $region19: #{positionwise_ffn.1} parent=1 // pred_check_branch
      %20 = sbr.rel (0) target = $region21
    $region20: #{positionwise_ffn.1} parent=1 // pred_region
      _
    $region21: #{positionwise_ffn.1} parent=1 // pred_fallthru
      _
    %p22 = scmp.eq.s32.totalorder 0, 0
    // Predicated region
    $region22: #{positionwise_ffn.1} parent=1 // pred_check
      %p23 = pneg %p22
    $region23: #{positionwise_ffn.1} parent=1 // pred_check_branch
      %25 = sbr.rel (%p23) target = $region25
    $region24: #{positionwise_ffn.1} parent=1 // pred_region
      %vm26 = vcmask 261120
      %27 = vst.msk [vmem:[#allocation2] sm:$0xff] %vm26, 0.0
      %28 = vst.msk [vmem:[#allocation2 + $0x8] sm:$0xff] %vm26, 0.0
    $region25: #{positionwise_ffn.1} parent=1 // pred_fallthru
      _
    %v29 = vld [vmem:[%s0] sm:$0xf]
    %v30 = vld [vmem:[%s0 + $0x4] sm:$0xf]
    %v31 = vld [vmem:[%s1] sm:$0xf]
    %v32 = vld [vmem:[%s1 + $0x4] sm:$0xf]
    %v33 = vld [vmem:[%s1 + $0x8] sm:$0xf]
    %v34 = vld [vmem:[%s1 + $0xc] sm:$0xf]
    %v35 = vld [vmem:[%s2] sm:$0x1]
    %v37 = vperm.slane %v35, 0
    %v41 = vunpack.c.l.b16 %v29
    %v42 = vunpack.c.l.b16 %v30
    %v43 = vpack.c.b16 %v42, %v41
    %v48 = vunpack.c.l.b16 %v31
    %v49 = vunpack.c.l.b16 %v32
    %v50 = vunpack.c.l.b16 %v33
    %v51 = vunpack.c.l.b16 %v34
    %v52 = vpack.c.b16 %v49, %v48
    %v53 = vpack.c.b16 %v51, %v50
    %vm56 = vcmask 261120
    %v58 = vsel %vm56, %v43, 0
    %60 = vmatpush.bf16.msra.mxu0 0
    %61 = vmatpush.bf16.msra.mxu0 0
    %62 = vmatpush.bf16.msra.mxu0 0
    %63 = vmatpush.bf16.msra.mxu0 0
    %64 = vmatpush.bf16.msra.mxu0 0
    %65 = vmatpush.bf16.msra.mxu0 0
    %66 = vmatpush.bf16.msra.mxu0 %v53
    %67 = vmatpush.bf16.msra.mxu0 %v52
    %68 = vmatmul.bf16.gmra.mxu0 %v58
    %v69 = vpop.f32.mrf.mxu0
    %v70 = vadd.f32 %v37, %v69
    %v71 = vpop.f32.mrf.mxu0
    %v72 = vadd.f32 %v37, %v71
    %73 = vdwg.mxu0
    %v74 = vmax.f32 %v70, 0.0
    %v75 = vmax.f32 %v72, 0.0
    %v76 = vld [vmem:[#allocation2] sm:$0xff]
    %v77 = vld [vmem:[#allocation2 + $0x8] sm:$0xff]
    %v78 = vpack.c.bf16 %v75, %v74
    %v79 = vld [vmem:[%s3] sm:$0xf]
    %v80 = vld [vmem:[%s3 + $0x4] sm:$0xf]
    %v81 = vld [vmem:[%s3 + $0x8] sm:$0xf]
    %v82 = vld [vmem:[%s3 + $0xc] sm:$0xf]
    %v83 = vld [vmem:[%s3 + $0x10] sm:$0xf]
    %v84 = vld [vmem:[%s3 + $0x14] sm:$0xf]
    %v85 = vld [vmem:[%s3 + $0x18] sm:$0xf]
    %v86 = vld [vmem:[%s3 + $0x1c] sm:$0xf]
    %v95 = vunpack.c.l.b16 %v79
    %v96 = vunpack.c.l.b16 %v80
    %v97 = vunpack.c.l.b16 %v81
    %v98 = vunpack.c.l.b16 %v82
    %v99 = vunpack.c.l.b16 %v83
    %v100 = vunpack.c.l.b16 %v84
    %v101 = vunpack.c.l.b16 %v85
    %v102 = vunpack.c.l.b16 %v86
    %v103 = vpack.c.b16 %v96, %v95
    %v104 = vpack.c.b16 %v98, %v97
    %v105 = vpack.c.b16 %v100, %v99
    %v106 = vpack.c.b16 %v102, %v101
    %vm111 = vcmask 523264
    %v113 = vsel %vm111, %v78, 0
    %115 = vmatpush.bf16.msra.mxu0 0
    %116 = vmatpush.bf16.msra.mxu0 0
    %117 = vmatpush.bf16.msra.mxu0 0
    %118 = vmatpush.bf16.msra.mxu0 0
    %119 = vmatpush.bf16.msra.mxu0 %v106
    %120 = vmatpush.bf16.msra.mxu0 %v105
    %121 = vmatpush.bf16.msra.mxu0 %v104
    %122 = vmatpush.bf16.msra.mxu0 %v103
    %123 = vmatmul.bf16.gmra.mxu0 %v113
    %v124 = vpop.f32.mrf.mxu0
    %v125 = vadd.f32 0.0, %v124
    %v126 = vpop.f32.mrf.mxu0
    %v127 = vadd.f32 0.0, %v126
    %128 = vdwg.mxu0
    %v129 = vadd.f32 %v76, %v125
    %v130 = vadd.f32 %v77, %v127
    %131 = vst.msk [vmem:[#allocation2] sm:$0xff] %vm56, %v129
    %132 = vst.msk [vmem:[#allocation2 + $0x8] sm:$0xff] %vm56, %v130
    // Predicated region
    $region26: #{positionwise_ffn.1} parent=1 // pred_check
      %p133 = pneg %p22
    $region27: #{positionwise_ffn.1} parent=1 // pred_check_branch
      %135 = sbr.rel (%p133) target = $region29
    $region28: #{positionwise_ffn.1} parent=1 // pred_region
      %v136 = vld [vmem:[#allocation2] sm:$0xff]
      %v137 = vld [vmem:[#allocation2 + $0x8] sm:$0xff]
      %v138 = vld [vmem:[%s4] sm:$0x1]
      %v140 = vperm.slane %v138, 0
      %v142 = vadd.f32 %v136, %v140
      %v143 = vadd.f32 %v137, %v140
      %144 = vst.msk [vmem:[#allocation2] sm:$0xff] %vm56, %v142
      %145 = vst.msk [vmem:[#allocation2 + $0x8] sm:$0xff] %vm56, %v143
    $region29: #{positionwise_ffn.1} parent=1 // pred_fallthru
      _
    // Predicated region
    $region30: #{positionwise_ffn.1} parent=1 // pred_check
      _
    $region31: #{positionwise_ffn.1} parent=1 // pred_check_branch
      %147 = sbr.rel (0) target = $region33
    $region32: #{positionwise_ffn.1} parent=1 // pred_region
      %149 = vsyncadd [#allocation3], 0
      %s150 = sshll.u32 [#allocation2], 4
      %s151 = int_to_ptr.vmem [resolvable:$true] %s150
      %s152 = sshll.u32 %s5, 4
      %s153 = int_to_ptr.hbm [resolvable:$true] %s152
      %158 = dma.vmem_to_hbm [thread:$0]  %s151, 256, %s153, [#allocation3], 128, 128, 8
    $region33: #{positionwise_ffn.1} parent=1 // pred_fallthru
      _
    // Predicated region
    $region34: #{positionwise_ffn.1} parent=1 // pred_check
      _
    $region35: #{positionwise_ffn.1} parent=1 // pred_check_branch
      %160 = sbr.rel (0) target = $region37
    $region36: #{positionwise_ffn.1} parent=1 // pred_region
      %162 = dma.done [#allocation3], 256
    $region37: #{positionwise_ffn.1} parent=1 // pred_fallthru
      _
    %163 = vsyncpa [#allocation3], 1

</llo_original>
